<compile_context>
chip_gen: v7x
topology: tpu7x:2x2x1
jax: 0.10.0
libtpu: 0.0.40
codegen_flags: <defaults>
</compile_context>

<pallas_src>
import functools

import jax
import jax.numpy as jnp
from jax.experimental import pallas as pl
from jax.experimental.pallas import tpu as pltpu

LANE = 128


def _pad_axis(a, axis, target):
    pad = target - a.shape[axis]
    if pad <= 0:
        return a
    widths = [(0, 0)] * a.ndim
    widths[axis] = (0, pad)
    return jnp.pad(a, widths)


def _consistency_scorer_kernel(x_ref, w_ih_ref, b_h_ref, whh_ref, wfc_ref,
                               bfc_ref, out_ref, hid_ref, hs_ref):
    """Elman-RNN (relu) recurrence + output Linear for one sequence.

    x_ref    : (1, B, F)   bf16   concatenated [task | subgoal | img] features
    w_ih_ref : (F, HP)     bf16   packed W_ih^T, H zero-padded to HP=128
    b_h_ref  : (1, HP)     f32    b_ih + b_hh, pre-folded, zero-padded
    whh_ref  : (HP, HP)    bf16   W_hh^T, zero-padded
    wfc_ref  : (HP, VP)    bf16   W_fc^T, zero-padded
    bfc_ref  : (1, VP)     f32    zero-padded
    out_ref  : (1, B, VP)  f32    fc(outputs), lane-dense store
    hid_ref  : (1, 1, HP)  f32    final RNN hidden state
    hs_ref   : (B, HP)     f32    VMEM scratch: per-step hidden rows
    """
    f32 = jnp.float32
    cd = whh_ref.dtype                         # bf16 MXU operand dtype

    # Hot path 1: input-to-hidden projection for ALL timesteps, one MXU pass.
    xh = (jnp.dot(x_ref[0], w_ih_ref[...], preferred_element_type=f32)
          + b_h_ref[...])                      # (B, HP) f32

    # Hot path 2: serial relu recurrence, fully unrolled (seq_len = B = 8).
    # `whh` is loop-invariant -> held in vregs as a stationary MXU RHS.
    # Padded-lane invariant: lanes >= H of `h` stay exactly 0 because the
    # padded columns of whh and b_h are 0 and relu(0) == 0.  Do NOT change the
    # bias folding / activation without preserving this.
    whh = whh_ref[...]
    seq_len, hp = xh.shape
    h = jnp.zeros((1, hp), f32)
    for t in range(seq_len):                   # static Python unroll
        pre = xh[t:t + 1, :] + jnp.dot(h.astype(cd), whh,
                                       preferred_element_type=f32)
        h = jnp.maximum(pre, 0.0)
        hs_ref[t:t + 1, :] = h                 # unmasked 128-lane row store
    hid_ref[0] = h

    # Hot path 3: fc projection of all hidden states in one MXU matmul.
    out_ref[0] = (jnp.dot(hs_ref[...].astype(cd), wfc_ref[...],
                          preferred_element_type=f32)
                  + bfc_ref[...])


def prepare_params(params, compute_dtype=jnp.bfloat16):
    """ONE-TIME weight prep (transpose / zero-pad / bf16 cast).

    Call once and cache the result; deliberately kept OUT of the per-call
    jitted path (perf feedback #1).  Zero padding establishes the padded-lane
    invariant the kernel relies on.
    """
    w_ih, b_ih = params["w_ih"], params["b_ih"]
    w_hh, b_hh = params["w_hh"], params["b_hh"]
    w_fc, b_fc = params["w_fc"], params["b_fc"]
    H = w_hh.shape[0]
    V = w_fc.shape[0]
    HP = ((H + LANE - 1) // LANE) * LANE
    VP = ((V + LANE - 1) // LANE) * LANE

    # Single packed (F, HP) input-projection weight -> one DMA, one MXU pass.
    w_ih_t = _pad_axis(w_ih.T, 1, HP).astype(compute_dtype)
    # b_hh folded into the input-projection bias; pad lanes are exactly zero.
    b_h = _pad_axis((b_ih + b_hh).reshape(1, -1), 1, HP).astype(jnp.float32)
    whh_t = _pad_axis(_pad_axis(w_hh.T, 0, HP), 1, HP).astype(compute_dtype)
    wfc_t = _pad_axis(_pad_axis(w_fc.T, 0, HP), 1, VP).astype(compute_dtype)
    bfc = _pad_axis(b_fc.reshape(1, -1), 1, VP).astype(jnp.float32)

    prepped = (w_ih_t, b_h, whh_t, wfc_t, bfc)
    dims = {"hidden_dim": H, "out_dim": V}
    return prepped, dims


def _invoke_kernel(x, prepped):
    """x: (N, B, F) bf16 — N independent scorer calls (grid axis, parallel)."""
    w_ih_t, b_h, whh_t, wfc_t, bfc = prepped
    N, B, F = x.shape
    HP = whh_t.shape[0]
    VP = wfc_t.shape[1]

    operands = (x, w_ih_t, b_h, whh_t, wfc_t, bfc)
    bytes_accessed = (sum(int(a.size) * a.dtype.itemsize for a in operands)
                      + N * B * VP * 4 + N * HP * 4)
    cost = pl.CostEstimate(
        flops=2 * N * B * (F * HP + HP * HP + HP * VP),
        transcendentals=0,
        bytes_accessed=bytes_accessed)

    grid_spec = pltpu.PrefetchScalarGridSpec(
        num_scalar_prefetch=0,
        grid=(N,),
        in_specs=[
            pl.BlockSpec((1, B, F), lambda n: (n, 0, 0)),
            pl.BlockSpec((F, HP), lambda n: (0, 0)),     # weights stay resident
            pl.BlockSpec((1, HP), lambda n: (0, 0)),
            pl.BlockSpec((HP, HP), lambda n: (0, 0)),
            pl.BlockSpec((HP, VP), lambda n: (0, 0)),
            pl.BlockSpec((1, VP), lambda n: (0, 0)),
        ],
        out_specs=[
            pl.BlockSpec((1, B, VP), lambda n: (n, 0, 0)),
            pl.BlockSpec((1, 1, HP), lambda n: (n, 0, 0)),
        ],
        scratch_shapes=[pltpu.VMEM((B, HP), jnp.float32)],
    )

    return pl.pallas_call(
        _consistency_scorer_kernel,
        out_shape=(jax.ShapeDtypeStruct((N, B, VP), jnp.float32),
                   jax.ShapeDtypeStruct((N, 1, HP), jnp.float32)),
        grid_spec=grid_spec,
        compiler_params=pltpu.CompilerParams(
            dimension_semantics=("parallel",)),
        cost_estimate=cost,
    )(x, w_ih_t, b_h, whh_t, wfc_t, bfc)


@functools.partial(jax.jit, static_argnames=("hidden_dim", "out_dim"))
def consistency_scorer_forward(task, subgoal, img_feat, prepped, hidden=None, *,
                               hidden_dim, out_dim):
    """Mirrors ConsistencyScorer.forward for one (task, subgoal, obs) call.
    `hidden` is ignored, exactly as the PyTorch module ignores it in
    `self.scorer(x)`."""
    del hidden
    # Concat + bf16 cast wrapper-side: one lane-contiguous input DMA at half
    # the bytes; numerics identical (operands go to bf16 before the MXU).
    x = jnp.concatenate([task, subgoal, img_feat], axis=-1).astype(jnp.bfloat16)
    out_p, hid_p = _invoke_kernel(x[None], prepped)
    # Slice zero-padded lanes off outside the kernel (stores stay lane-dense).
    return out_p[0, :, :out_dim], hid_p[0, :, :hidden_dim]


@functools.partial(jax.jit, static_argnames=("hidden_dim", "out_dim"))
def consistency_scorer_forward_batched(task, subgoal, img_feat, prepped, *,
                                       hidden_dim, out_dim):
    """N independent scorer calls in one launch (leading axis N).  The grid
    axis is marked "parallel" so both v7x TensorCores are used; harmless on
    the single-core v5e/v6e."""
    x = jnp.concatenate([task, subgoal, img_feat], axis=-1).astype(jnp.bfloat16)
    out_p, hid_p = _invoke_kernel(x, prepped)
    return out_p[..., :out_dim], hid_p[..., :hidden_dim]


def init_params(key, feature_dim, hidden_dim, vocab_size):
    """Deterministic parameter init matching nn.RNN / nn.Linear shapes
    (uniform(-1/sqrt(H), 1/sqrt(H)), like PyTorch's default)."""
    ks = jax.random.split(key, 6)
    bound = 1.0 / jnp.sqrt(hidden_dim)
    u = lambda k, shape, b: jax.random.uniform(k, shape, jnp.float32, -b, b)
    return {
        "w_ih": u(ks[0], (hidden_dim, feature_dim), bound),
        "b_ih": u(ks[1], (hidden_dim,), bound),
        "w_hh": u(ks[2], (hidden_dim, hidden_dim), bound),
        "b_hh": u(ks[3], (hidden_dim,), bound),
        "w_fc": u(ks[4], (vocab_size, hidden_dim), bound),
        "b_fc": u(ks[5], (vocab_size,), bound),
    }


def reference_forward_matched(task, subgoal, img_feat, params):
    """Pure-JAX reference using the SAME bf16-operand / f32-accumulate policy
    as the kernel — tight check of the Pallas lowering itself."""
    cd, f32 = jnp.bfloat16, jnp.float32
    x = jnp.concatenate([task, subgoal, img_feat], axis=-1).astype(cd)
    xh = (jnp.dot(x, params["w_ih"].T.astype(cd), preferred_element_type=f32)
          + (params["b_ih"] + params["b_hh"]).reshape(1, -1))
    whh_t = params["w_hh"].T.astype(cd)
    H = params["w_hh"].shape[0]
    h = jnp.zeros((1, H), f32)
    rows = []
    for t in range(x.shape[0]):
        pre = xh[t:t + 1] + jnp.dot(h.astype(cd), whh_t,
                                    preferred_element_type=f32)
        h = jnp.maximum(pre, 0.0)
        rows.append(h)
    hs = jnp.concatenate(rows, axis=0)
    out = (jnp.dot(hs.astype(cd), params["w_fc"].T.astype(cd),
                   preferred_element_type=f32)
           + params["b_fc"].reshape(1, -1))
    return out, h


def reference_forward_f32(task, subgoal, img_feat, params):
    """Pure-f32 reference of the module semantics (loose sanity check;
    the kernel uses bf16 MXU operands with f32 accumulation)."""
    x = jnp.concatenate([task, subgoal, img_feat], axis=-1).astype(jnp.float32)
    w_ih, b_ih = params["w_ih"], params["b_ih"]
    w_hh, b_hh = params["w_hh"], params["b_hh"]
    w_fc, b_fc = params["w_fc"], params["b_fc"]
    H = w_hh.shape[0]
    h = jnp.zeros((H,), jnp.float32)
    hs = []
    for t in range(x.shape[0]):
        h = jax.nn.relu(x[t] @ w_ih.T + b_ih + h @ w_hh.T + b_hh)
        hs.append(h)
    hs = jnp.stack(hs, axis=0)
    return hs @ w_fc.T + b_fc, h[None, :]


if __name__ == "__main__":
    # Small shapes consistent with the module:
    #   vocab_size=32 (text_feature_extractor=None -> text_feature_dim=32),
    #   img_feature_dim=512 (CLIP), hidden_dims=[32], batch=8.
    B = 8
    VOCAB = 32
    IMG_DIM = 512
    HIDDEN = 32
    FEATURE_DIM = IMG_DIM + 2 * VOCAB   # concat_before=False path

    key = jax.random.PRNGKey(0)
    k_task, k_sub, k_img, k_param, k_b = jax.random.split(key, 5)

    # TODO(synk): frozen CLIP encode_image / flan-t5 text encoders are external
    # pretrained models with no Pallas equivalent; their outputs are modeled as
    # deterministic random feature vectors here.
    task = jax.random.normal(k_task, (B, VOCAB), jnp.float32)
    subgoal = jax.random.normal(k_sub, (B, VOCAB), jnp.float32)
    img_feat = jax.random.normal(k_img, (B, IMG_DIM), jnp.float32)

    params = init_params(k_param, FEATURE_DIM, HIDDEN, VOCAB)

    # One-time weight prep, cached outside the per-call path.
    prepped, dims = prepare_params(params)

    outputs, hidden = consistency_scorer_forward(
        task, subgoal, img_feat, prepped, None, **dims)
    jax.block_until_ready((outputs, hidden))
    assert outputs.shape == (B, VOCAB) and hidden.shape == (1, HIDDEN)

    # Tight check vs a reference that uses the same mixed-precision policy.
    m_out, m_hid = reference_forward_matched(task, subgoal, img_feat, params)
    assert jnp.allclose(outputs, m_out, atol=2e-3, rtol=2e-3)
    assert jnp.allclose(hidden, m_hid, atol=2e-3, rtol=2e-3)

    # Loose sanity check vs the pure-f32 module semantics (bf16 operand noise).
    f_out, f_hid = reference_forward_f32(task, subgoal, img_feat, params)
    assert jnp.allclose(outputs, f_out, atol=4e-1, rtol=1e-1)
    assert jnp.allclose(hidden, f_hid, atol=4e-1, rtol=1e-1)

    # Batched (grid) path: sequence 0 duplicates the single-call inputs.
    task_b = jnp.stack([task, jax.random.normal(k_b, (B, VOCAB), jnp.float32)])
    sub_b = jnp.stack([subgoal, subgoal[::-1]])
    img_b = jnp.stack([img_feat, img_feat[::-1]])
    out_b, hid_b = consistency_scorer_forward_batched(
        task_b, sub_b, img_b, prepped, **dims)
    jax.block_until_ready((out_b, hid_b))
    assert out_b.shape == (2, B, VOCAB) and hid_b.shape == (2, 1, HIDDEN)
    assert jnp.allclose(out_b[0], outputs, atol=1e-5, rtol=1e-5)
    assert jnp.allclose(hid_b[0], hidden, atol=1e-5, rtol=1e-5)

    print("KERNEL_OK")
</pallas_src>

<mosaic_0001>
module attributes {stable_mosaic.version = 11 : i64} {
  func.func @_consistency_scorer_kernel(%arg0: i32, %arg1: memref<1x8x576xbf16, #tpu.memory_space<vmem>>, %arg2: memref<576x128xbf16, #tpu.memory_space<vmem>>, %arg3: memref<1x128xf32, #tpu.memory_space<vmem>>, %arg4: memref<128x128xbf16, #tpu.memory_space<vmem>>, %arg5: memref<128x128xbf16, #tpu.memory_space<vmem>>, %arg6: memref<1x128xf32, #tpu.memory_space<vmem>>, %arg7: memref<1x8x128xf32, #tpu.memory_space<vmem>>, %arg8: memref<1x1x128xf32, #tpu.memory_space<vmem>>, %arg9: memref<8x128xf32, #tpu.memory_space<vmem>>) attributes {dimension_semantics = [#tpu.dimension_semantics<parallel>], iteration_bounds = array<i64: 1>, scalar_prefetch = 0 : i64, scratch_operands = 1 : i64, tpu.core_type = #tpu.core_type<tc>, window_params = [{transform_indices = @transform_0, window_bounds = array<i64: 1, 8, 576>}, {pipeline_mode = #tpu.pipeline_mode<synchronous>, transform_indices = @transform_1, window_bounds = array<i64: 576, 128>}, {pipeline_mode = #tpu.pipeline_mode<synchronous>, transform_indices = @transform_2, window_bounds = array<i64: 1, 128>}, {pipeline_mode = #tpu.pipeline_mode<synchronous>, transform_indices = @transform_3, window_bounds = array<i64: 128, 128>}, {pipeline_mode = #tpu.pipeline_mode<synchronous>, transform_indices = @transform_4, window_bounds = array<i64: 128, 128>}, {pipeline_mode = #tpu.pipeline_mode<synchronous>, transform_indices = @transform_5, window_bounds = array<i64: 1, 128>}, {transform_indices = @transform_6, window_bounds = array<i64: 1, 8, 128>}, {transform_indices = @transform_7, window_bounds = array<i64: 1, 1, 128>}]} {
    %c0 = arith.constant 0 : index
    %c0_0 = arith.constant 0 : index
    %c0_1 = arith.constant 0 : index
    %0 = vector.load %arg1[%c0, %c0_0, %c0_1] : memref<1x8x576xbf16, #tpu.memory_space<vmem>>, vector<1x8x576xbf16>
    %1 = vector.shape_cast %0 : vector<1x8x576xbf16> to vector<8x576xbf16>
    %c0_2 = arith.constant 0 : index
    %c0_3 = arith.constant 0 : index
    %2 = vector.load %arg2[%c0_2, %c0_3] : memref<576x128xbf16, #tpu.memory_space<vmem>>, vector<576x128xbf16>
    %cst = arith.constant dense<0.000000e+00> : vector<8x128xf32>
    %3 = tpu.matmul %1, %2, %cst {dimension_numbers = #tpu.dot_dimension_numbers<[1], [0], [0], [1], [0, 0, 1, 1], [], []>} : vector<8x576xbf16>, vector<576x128xbf16>, vector<8x128xf32> -> vector<8x128xf32>
    %c0_4 = arith.constant 0 : index
    %c0_5 = arith.constant 0 : index
    %4 = vector.load %arg3[%c0_4, %c0_5] : memref<1x128xf32, #tpu.memory_space<vmem>>, vector<1x128xf32>
    %5 = vector.broadcast %4 : vector<1x128xf32> to vector<8x128xf32>
    %6 = arith.addf %3, %5 : vector<8x128xf32>
    %c0_6 = arith.constant 0 : index
    %c0_7 = arith.constant 0 : index
    %7 = vector.load %arg4[%c0_6, %c0_7] : memref<128x128xbf16, #tpu.memory_space<vmem>>, vector<128x128xbf16>
    %cst_8 = arith.constant 0.000000e+00 : f32
    %8 = vector.broadcast %cst_8 : f32 to vector<1x128xf32>
    %9 = vector.extract_strided_slice %6 {offsets = [0, 0], sizes = [1, 128], strides = [1, 1]} : vector<8x128xf32> to vector<1x128xf32>
    %10 = arith.truncf %8 : vector<1x128xf32> to vector<1x128xbf16>
    %cst_9 = arith.constant dense<0.000000e+00> : vector<1x128xf32>
    %11 = tpu.matmul %10, %7, %cst_9 {dimension_numbers = #tpu.dot_dimension_numbers<[1], [0], [0], [1], [0, 0, 1, 1], [], []>} : vector<1x128xbf16>, vector<128x128xbf16>, vector<1x128xf32> -> vector<1x128xf32>
    %12 = arith.addf %9, %11 : vector<1x128xf32>
    %cst_10 = arith.constant 0.000000e+00 : f32
    %13 = vector.broadcast %cst_10 : f32 to vector<1x128xf32>
    %14 = arith.maximumf %12, %13 : vector<1x128xf32>
    %c0_11 = arith.constant 0 : index
    %c0_12 = arith.constant 0 : index
    %15 = vector.load %arg9[%c0_11, %c0_12] : memref<8x128xf32, #tpu.memory_space<vmem>>, vector<1x128xf32>
    tpu.vector_store %arg9[%c0_11, %c0_12], %14 {strides = array<i32>} : memref<8x128xf32, #tpu.memory_space<vmem>>, vector<1x128xf32>,
    %16 = vector.extract_strided_slice %6 {offsets = [1, 0], sizes = [1, 128], strides = [1, 1]} : vector<8x128xf32> to vector<1x128xf32>
    %17 = arith.truncf %14 : vector<1x128xf32> to vector<1x128xbf16>
    %cst_13 = arith.constant dense<0.000000e+00> : vector<1x128xf32>
    %18 = tpu.matmul %17, %7, %cst_13 {dimension_numbers = #tpu.dot_dimension_numbers<[1], [0], [0], [1], [0, 0, 1, 1], [], []>} : vector<1x128xbf16>, vector<128x128xbf16>, vector<1x128xf32> -> vector<1x128xf32>
    %19 = arith.addf %16, %18 : vector<1x128xf32>
    %cst_14 = arith.constant 0.000000e+00 : f32
    %20 = vector.broadcast %cst_14 : f32 to vector<1x128xf32>
    %21 = arith.maximumf %19, %20 : vector<1x128xf32>
    %c1 = arith.constant 1 : index
    %c0_15 = arith.constant 0 : index
    %22 = vector.load %arg9[%c1, %c0_15] : memref<8x128xf32, #tpu.memory_space<vmem>>, vector<1x128xf32>
    tpu.vector_store %arg9[%c1, %c0_15], %21 {strides = array<i32>} : memref<8x128xf32, #tpu.memory_space<vmem>>, vector<1x128xf32>,
    %23 = vector.extract_strided_slice %6 {offsets = [2, 0], sizes = [1, 128], strides = [1, 1]} : vector<8x128xf32> to vector<1x128xf32>
    %24 = arith.truncf %21 : vector<1x128xf32> to vector<1x128xbf16>
    %cst_16 = arith.constant dense<0.000000e+00> : vector<1x128xf32>
    %25 = tpu.matmul %24, %7, %cst_16 {dimension_numbers = #tpu.dot_dimension_numbers<[1], [0], [0], [1], [0, 0, 1, 1], [], []>} : vector<1x128xbf16>, vector<128x128xbf16>, vector<1x128xf32> -> vector<1x128xf32>
    %26 = arith.addf %23, %25 : vector<1x128xf32>
    %cst_17 = arith.constant 0.000000e+00 : f32
    %27 = vector.broadcast %cst_17 : f32 to vector<1x128xf32>
    %28 = arith.maximumf %26, %27 : vector<1x128xf32>
    %c2 = arith.constant 2 : index
    %c0_18 = arith.constant 0 : index
    %29 = vector.load %arg9[%c2, %c0_18] : memref<8x128xf32, #tpu.memory_space<vmem>>, vector<1x128xf32>
    tpu.vector_store %arg9[%c2, %c0_18], %28 {strides = array<i32>} : memref<8x128xf32, #tpu.memory_space<vmem>>, vector<1x128xf32>,
    %30 = vector.extract_strided_slice %6 {offsets = [3, 0], sizes = [1, 128], strides = [1, 1]} : vector<8x128xf32> to vector<1x128xf32>
    %31 = arith.truncf %28 : vector<1x128xf32> to vector<1x128xbf16>
    %cst_19 = arith.constant dense<0.000000e+00> : vector<1x128xf32>
    %32 = tpu.matmul %31, %7, %cst_19 {dimension_numbers = #tpu.dot_dimension_numbers<[1], [0], [0], [1], [0, 0, 1, 1], [], []>} : vector<1x128xbf16>, vector<128x128xbf16>, vector<1x128xf32> -> vector<1x128xf32>
    %33 = arith.addf %30, %32 : vector<1x128xf32>
    %cst_20 = arith.constant 0.000000e+00 : f32
    %34 = vector.broadcast %cst_20 : f32 to vector<1x128xf32>
    %35 = arith.maximumf %33, %34 : vector<1x128xf32>
    %c3 = arith.constant 3 : index
    %c0_21 = arith.constant 0 : index
    %36 = vector.load %arg9[%c3, %c0_21] : memref<8x128xf32, #tpu.memory_space<vmem>>, vector<1x128xf32>
    tpu.vector_store %arg9[%c3, %c0_21], %35 {strides = array<i32>} : memref<8x128xf32, #tpu.memory_space<vmem>>, vector<1x128xf32>,
    %37 = vector.extract_strided_slice %6 {offsets = [4, 0], sizes = [1, 128], strides = [1, 1]} : vector<8x128xf32> to vector<1x128xf32>
    %38 = arith.truncf %35 : vector<1x128xf32> to vector<1x128xbf16>
    %cst_22 = arith.constant dense<0.000000e+00> : vector<1x128xf32>
    %39 = tpu.matmul %38, %7, %cst_22 {dimension_numbers = #tpu.dot_dimension_numbers<[1], [0], [0], [1], [0, 0, 1, 1], [], []>} : vector<1x128xbf16>, vector<128x128xbf16>, vector<1x128xf32> -> vector<1x128xf32>
    %40 = arith.addf %37, %39 : vector<1x128xf32>
    %cst_23 = arith.constant 0.000000e+00 : f32
    %41 = vector.broadcast %cst_23 : f32 to vector<1x128xf32>
    %42 = arith.maximumf %40, %41 : vector<1x128xf32>
    %c4 = arith.constant 4 : index
    %c0_24 = arith.constant 0 : index
    %43 = vector.load %arg9[%c4, %c0_24] : memref<8x128xf32, #tpu.memory_space<vmem>>, vector<1x128xf32>
    tpu.vector_store %arg9[%c4, %c0_24], %42 {strides = array<i32>} : memref<8x128xf32, #tpu.memory_space<vmem>>, vector<1x128xf32>,
    %44 = vector.extract_strided_slice %6 {offsets = [5, 0], sizes = [1, 128], strides = [1, 1]} : vector<8x128xf32> to vector<1x128xf32>
    %45 = arith.truncf %42 : vector<1x128xf32> to vector<1x128xbf16>
    %cst_25 = arith.constant dense<0.000000e+00> : vector<1x128xf32>
    %46 = tpu.matmul %45, %7, %cst_25 {dimension_numbers = #tpu.dot_dimension_numbers<[1], [0], [0], [1], [0, 0, 1, 1], [], []>} : vector<1x128xbf16>, vector<128x128xbf16>, vector<1x128xf32> -> vector<1x128xf32>
    %47 = arith.addf %44, %46 : vector<1x128xf32>
    %cst_26 = arith.constant 0.000000e+00 : f32
    %48 = vector.broadcast %cst_26 : f32 to vector<1x128xf32>
    %49 = arith.maximumf %47, %48 : vector<1x128xf32>
    %c5 = arith.constant 5 : index
    %c0_27 = arith.constant 0 : index
    %50 = vector.load %arg9[%c5, %c0_27] : memref<8x128xf32, #tpu.memory_space<vmem>>, vector<1x128xf32>
    tpu.vector_store %arg9[%c5, %c0_27], %49 {strides = array<i32>} : memref<8x128xf32, #tpu.memory_space<vmem>>, vector<1x128xf32>,
    %51 = vector.extract_strided_slice %6 {offsets = [6, 0], sizes = [1, 128], strides = [1, 1]} : vector<8x128xf32> to vector<1x128xf32>
    %52 = arith.truncf %49 : vector<1x128xf32> to vector<1x128xbf16>
    %cst_28 = arith.constant dense<0.000000e+00> : vector<1x128xf32>
    %53 = tpu.matmul %52, %7, %cst_28 {dimension_numbers = #tpu.dot_dimension_numbers<[1], [0], [0], [1], [0, 0, 1, 1], [], []>} : vector<1x128xbf16>, vector<128x128xbf16>, vector<1x128xf32> -> vector<1x128xf32>
    %54 = arith.addf %51, %53 : vector<1x128xf32>
    %cst_29 = arith.constant 0.000000e+00 : f32
    %55 = vector.broadcast %cst_29 : f32 to vector<1x128xf32>
    %56 = arith.maximumf %54, %55 : vector<1x128xf32>
    %c6 = arith.constant 6 : index
    %c0_30 = arith.constant 0 : index
    %57 = vector.load %arg9[%c6, %c0_30] : memref<8x128xf32, #tpu.memory_space<vmem>>, vector<1x128xf32>
    tpu.vector_store %arg9[%c6, %c0_30], %56 {strides = array<i32>} : memref<8x128xf32, #tpu.memory_space<vmem>>, vector<1x128xf32>,
    %58 = vector.extract_strided_slice %6 {offsets = [7, 0], sizes = [1, 128], strides = [1, 1]} : vector<8x128xf32> to vector<1x128xf32>
    %59 = arith.truncf %56 : vector<1x128xf32> to vector<1x128xbf16>
    %cst_31 = arith.constant dense<0.000000e+00> : vector<1x128xf32>
    %60 = tpu.matmul %59, %7, %cst_31 {dimension_numbers = #tpu.dot_dimension_numbers<[1], [0], [0], [1], [0, 0, 1, 1], [], []>} : vector<1x128xbf16>, vector<128x128xbf16>, vector<1x128xf32> -> vector<1x128xf32>
    %61 = arith.addf %58, %60 : vector<1x128xf32>
    %cst_32 = arith.constant 0.000000e+00 : f32
    %62 = vector.broadcast %cst_32 : f32 to vector<1x128xf32>
    %63 = arith.maximumf %61, %62 : vector<1x128xf32>
    %c7 = arith.constant 7 : index
    %c0_33 = arith.constant 0 : index
    %64 = vector.load %arg9[%c7, %c0_33] : memref<8x128xf32, #tpu.memory_space<vmem>>, vector<1x128xf32>
    tpu.vector_store %arg9[%c7, %c0_33], %63 {strides = array<i32>} : memref<8x128xf32, #tpu.memory_space<vmem>>, vector<1x128xf32>,
    %c0_34 = arith.constant 0 : index
    %c0_35 = arith.constant 0 : index
    %c0_36 = arith.constant 0 : index
    %65 = vector.load %arg8[%c0_34, %c0_35, %c0_36] : memref<1x1x128xf32, #tpu.memory_space<vmem>>, vector<1x1x128xf32>
    %66 = vector.shape_cast %65 : vector<1x1x128xf32> to vector<1x128xf32>
    %67 = vector.shape_cast %63 : vector<1x128xf32> to vector<1x1x128xf32>
    tpu.vector_store %arg8[%c0_34, %c0_35, %c0_36], %67 {strides = array<i32>} : memref<1x1x128xf32, #tpu.memory_space<vmem>>, vector<1x1x128xf32>,
    %c0_37 = arith.constant 0 : index
    %c0_38 = arith.constant 0 : index
    %68 = vector.load %arg9[%c0_37, %c0_38] : memref<8x128xf32, #tpu.memory_space<vmem>>, vector<8x128xf32>
    %69 = arith.truncf %68 : vector<8x128xf32> to vector<8x128xbf16>
    %c0_39 = arith.constant 0 : index
    %c0_40 = arith.constant 0 : index
    %70 = vector.load %arg5[%c0_39, %c0_40] : memref<128x128xbf16, #tpu.memory_space<vmem>>, vector<128x128xbf16>
    %cst_41 = arith.constant dense<0.000000e+00> : vector<8x128xf32>
    %71 = tpu.matmul %69, %70, %cst_41 {dimension_numbers = #tpu.dot_dimension_numbers<[1], [0], [0], [1], [0, 0, 1, 1], [], []>} : vector<8x128xbf16>, vector<128x128xbf16>, vector<8x128xf32> -> vector<8x128xf32>
    %c0_42 = arith.constant 0 : index
    %c0_43 = arith.constant 0 : index
    %72 = vector.load %arg6[%c0_42, %c0_43] : memref<1x128xf32, #tpu.memory_space<vmem>>, vector<1x128xf32>
    %73 = vector.broadcast %72 : vector<1x128xf32> to vector<8x128xf32>
    %74 = arith.addf %71, %73 : vector<8x128xf32>
    %c0_44 = arith.constant 0 : index
    %c0_45 = arith.constant 0 : index
    %c0_46 = arith.constant 0 : index
    %75 = vector.load %arg7[%c0_44, %c0_45, %c0_46] : memref<1x8x128xf32, #tpu.memory_space<vmem>>, vector<1x8x128xf32>
    %76 = vector.shape_cast %75 : vector<1x8x128xf32> to vector<8x128xf32>
    %77 = vector.shape_cast %74 : vector<8x128xf32> to vector<1x8x128xf32>
    tpu.vector_store %arg7[%c0_44, %c0_45, %c0_46], %77 {strides = array<i32>} : memref<1x8x128xf32, #tpu.memory_space<vmem>>, vector<1x8x128xf32>,
    return
  }
  func.func @transform_0(%arg0: i32) -> (i32, i32, i32) {
    %c0_i32 = arith.constant 0 : i32
    %c0_i32_0 = arith.constant 0 : i32
    %c0_i32_1 = arith.constant 0 : i32
    return %arg0, %c0_i32, %c0_i32_0 : i32, i32, i32
  }
  func.func @transform_1(%arg0: i32) -> (i32, i32) {
    %c0_i32 = arith.constant 0 : i32
    %c0_i32_0 = arith.constant 0 : i32
    %c0_i32_1 = arith.constant 0 : i32
    return %c0_i32, %c0_i32_0 : i32, i32
  }
  func.func @transform_2(%arg0: i32) -> (i32, i32) {
    %c0_i32 = arith.constant 0 : i32
    %c0_i32_0 = arith.constant 0 : i32
    %c0_i32_1 = arith.constant 0 : i32
    return %c0_i32, %c0_i32_0 : i32, i32
  }
  func.func @transform_3(%arg0: i32) -> (i32, i32) {
    %c0_i32 = arith.constant 0 : i32
    %c0_i32_0 = arith.constant 0 : i32
    %c0_i32_1 = arith.constant 0 : i32
    return %c0_i32, %c0_i32_0 : i32, i32
  }
  func.func @transform_4(%arg0: i32) -> (i32, i32) {
    %c0_i32 = arith.constant 0 : i32
    %c0_i32_0 = arith.constant 0 : i32
    %c0_i32_1 = arith.constant 0 : i32
    return %c0_i32, %c0_i32_0 : i32, i32
  }
  func.func @transform_5(%arg0: i32) -> (i32, i32) {
    %c0_i32 = arith.constant 0 : i32
    %c0_i32_0 = arith.constant 0 : i32
    %c0_i32_1 = arith.constant 0 : i32
    return %c0_i32, %c0_i32_0 : i32, i32
  }
  func.func @transform_6(%arg0: i32) -> (i32, i32, i32) {
    %c0_i32 = arith.constant 0 : i32
    %c0_i32_0 = arith.constant 0 : i32
    %c0_i32_1 = arith.constant 0 : i32
    return %arg0, %c0_i32, %c0_i32_0 : i32, i32, i32
  }
  func.func @transform_7(%arg0: i32) -> (i32, i32, i32) {
    %c0_i32 = arith.constant 0 : i32
    %c0_i32_0 = arith.constant 0 : i32
    %c0_i32_1 = arith.constant 0 : i32
    return %arg0, %c0_i32, %c0_i32_0 : i32, i32, i32
  }
}

</mosaic_0001>

<llo_original>
// kernel: consistency_scorer_forward.1
$region0: #{consistency_scorer_forward.1}
  #allocation0 [shape = 'u32[]', space=smem, size = 0x4, offset = 0x4, fixed_abs, tag = 'smem constant byte address 0x4 - core index']
  #allocation1 [shape = 'u32[144,128]{1,0:T(1,128)}', space=vmem, size = 0x12000, scoped, tag = 'internal scratch']
  #allocation2 [shape = 'f32[8,128]{1,0:T(8,128)}', space=vmem, size = 0x1000, scoped, tag = 'scratch operand']
  %s0 = inlined_call_operand.vmem [shape: bf16[1,8,576], index: 0, kind: input, shape index: {}]
  %s1 = inlined_call_operand.hbm [shape: bf16[576,128], index: 1, kind: input, shape index: {}]
  %s2 = inlined_call_operand.vmem [shape: f32[1,128], index: 2, kind: input, shape index: {}]
  %s3 = inlined_call_operand.vmem [shape: bf16[128,128], index: 3, kind: input, shape index: {}]
  %s4 = inlined_call_operand.vmem [shape: bf16[128,128], index: 4, kind: input, shape index: {}]
  %s5 = inlined_call_operand.vmem [shape: f32[1,128], index: 5, kind: input, shape index: {}]
  %s6 = inlined_call_operand.vmem [shape: f32[1,8,128], index: 6, kind: output, shape index: {0}]
  %s7 = inlined_call_operand.vmem [shape: f32[1,1,128], index: 7, kind: output, shape index: {1}]
  %8 = xla_tuple %s6, %s7
  %s9 = sld [smem:[#allocation0]]
  $region46: #{consistency_scorer_forward.1} parent=0
    _
  %s11 = ssub.s32 1, %s9
  %s12 = scalar_select 0, %s11, %s9
  $region1: #{consistency_scorer_forward.1} parent=0
    #allocation3 [shape = 'u8[147456]{0}', space=vmem, size = 0x24000, scoped, tag = 'input window, operand 1, single buffered']
    #allocation4 [shape = 's32[1]{0}', space=sflag, size = 0x4, scoped, tag = 'scoped memory for consistency_scorer_forward.1']
    %13 = vsyncpa [#allocation4], 0
    // Predicated region
    $region2: #{consistency_scorer_forward.1} parent=1 // pred_check
      _
    $region3: #{consistency_scorer_forward.1} parent=1 // pred_check_branch
      %15 = sbr.rel (0) target = $region5
    $region4: #{consistency_scorer_forward.1} parent=1 // pred_region
      _
    $region5: #{consistency_scorer_forward.1} parent=1 // pred_fallthru
      _
    // Predicated region
    $region6: #{consistency_scorer_forward.1} parent=1 // pred_check
      _
    $region7: #{consistency_scorer_forward.1} parent=1 // pred_check_branch
      %17 = sbr.rel (0) target = $region9
    $region8: #{consistency_scorer_forward.1} parent=1 // pred_region
      %s19 = ssub.s32 4608, 4608
      %20 = vsyncadd [#allocation4], %s19
      %s21 = sshll.u32 [#allocation3], 4
      %s22 = int_to_ptr.vmem [resolvable:$true] %s21
      %27 = dma.hbm_to_vmem [thread:$0]  %s1, 4608, %s22, [#allocation4], 64, 64, 4
    $region9: #{consistency_scorer_forward.1} parent=1 // pred_fallthru
      _
    // Predicated region
    $region10: #{consistency_scorer_forward.1} parent=1 // pred_check
      _
    $region11: #{consistency_scorer_forward.1} parent=1 // pred_check_branch
      %29 = sbr.rel (0) target = $region13
    $region12: #{consistency_scorer_forward.1} parent=1 // pred_region
      _
    $region13: #{consistency_scorer_forward.1} parent=1 // pred_fallthru
      _
    // Predicated region
    $region14: #{consistency_scorer_forward.1} parent=1 // pred_check
      _
    $region15: #{consistency_scorer_forward.1} parent=1 // pred_check_branch
      %31 = sbr.rel (0) target = $region17
    $region16: #{consistency_scorer_forward.1} parent=1 // pred_region
      _
    $region17: #{consistency_scorer_forward.1} parent=1 // pred_fallthru
      _
    // Predicated region
    $region18: #{consistency_scorer_forward.1} parent=1 // pred_check
      _
    $region19: #{consistency_scorer_forward.1} parent=1 // pred_check_branch
      %33 = sbr.rel (0) target = $region21
    $region20: #{consistency_scorer_forward.1} parent=1 // pred_region
      _
    $region21: #{consistency_scorer_forward.1} parent=1 // pred_fallthru
      _
    // Predicated region
    $region22: #{consistency_scorer_forward.1} parent=1 // pred_check
      _
    $region23: #{consistency_scorer_forward.1} parent=1 // pred_check_branch
      %35 = sbr.rel (0) target = $region25
    $region24: #{consistency_scorer_forward.1} parent=1 // pred_region
      _
    $region25: #{consistency_scorer_forward.1} parent=1 // pred_fallthru
      _
    // Predicated region
    $region26: #{consistency_scorer_forward.1} parent=1 // pred_check
      _
    $region27: #{consistency_scorer_forward.1} parent=1 // pred_check_branch
      %37 = sbr.rel (0) target = $region29
    $region28: #{consistency_scorer_forward.1} parent=1 // pred_region
      %38 = dma.done [#allocation4], 4608
    $region29: #{consistency_scorer_forward.1} parent=1 // pred_fallthru
      _
    %v40 = vld [vmem:[%s0] sm:$0xff]
    %v41 = vld [vmem:[%s0 + $0x8] sm:$0xff]
    %v42 = vld [vmem:[%s0 + $0x10] sm:$0xf]
    %v43 = vld [vmem:[#allocation3] sm:$0xf]
    %v44 = vld [vmem:[#allocation3 + $0x4] sm:$0xf]
    %v45 = vld [vmem:[#allocation3 + $0x8] sm:$0xf]
    %v46 = vld [vmem:[#allocation3 + $0xc] sm:$0xf]
    %v47 = vld [vmem:[#allocation3 + $0x10] sm:$0xf]
    %v48 = vld [vmem:[#allocation3 + $0x14] sm:$0xf]
    %v49 = vld [vmem:[#allocation3 + $0x18] sm:$0xf]
    %v50 = vld [vmem:[#allocation3 + $0x1c] sm:$0xf]
    %v51 = vld [vmem:[#allocation3 + $0x20] sm:$0xf]
    %v52 = vld [vmem:[#allocation3 + $0x24] sm:$0xf]
    %v53 = vld [vmem:[#allocation3 + $0x28] sm:$0xf]
    %v54 = vld [vmem:[#allocation3 + $0x2c] sm:$0xf]
    %v55 = vld [vmem:[#allocation3 + $0x30] sm:$0xf]
    %v56 = vld [vmem:[#allocation3 + $0x34] sm:$0xf]
    %v57 = vld [vmem:[#allocation3 + $0x38] sm:$0xf]
    %v58 = vld [vmem:[#allocation3 + $0x3c] sm:$0xf]
    %v59 = vld [vmem:[#allocation3 + $0x40] sm:$0xf]
    %v60 = vld [vmem:[#allocation3 + $0x44] sm:$0xf]
    %v61 = vld [vmem:[#allocation3 + $0x48] sm:$0xf]
    %v62 = vld [vmem:[#allocation3 + $0x4c] sm:$0xf]
    %v63 = vld [vmem:[#allocation3 + $0x50] sm:$0xf]
    %v64 = vld [vmem:[#allocation3 + $0x54] sm:$0xf]
    %v65 = vld [vmem:[#allocation3 + $0x58] sm:$0xf]
    %v66 = vld [vmem:[#allocation3 + $0x5c] sm:$0xf]
    %v67 = vld [vmem:[#allocation3 + $0x60] sm:$0xf]
    %v68 = vld [vmem:[#allocation3 + $0x64] sm:$0xf]
    %v69 = vld [vmem:[#allocation3 + $0x68] sm:$0xf]
    %v70 = vld [vmem:[#allocation3 + $0x6c] sm:$0xf]
    %v71 = vld [vmem:[#allocation3 + $0x70] sm:$0xf]
    %v72 = vld [vmem:[#allocation3 + $0x74] sm:$0xf]
    %v73 = vld [vmem:[#allocation3 + $0x78] sm:$0xf]
    %v74 = vld [vmem:[#allocation3 + $0x7c] sm:$0xf]
    %v75 = vld [vmem:[#allocation3 + $0x80] sm:$0xf]
    %v76 = vld [vmem:[#allocation3 + $0x84] sm:$0xf]
    %v77 = vld [vmem:[#allocation3 + $0x88] sm:$0xf]
    %v78 = vld [vmem:[#allocation3 + $0x8c] sm:$0xf]
    %v79 = vld [vmem:[#allocation3 + $0x90] sm:$0xf]
    %v80 = vld [vmem:[#allocation3 + $0x94] sm:$0xf]
    %v81 = vld [vmem:[#allocation3 + $0x98] sm:$0xf]
    %v82 = vld [vmem:[#allocation3 + $0x9c] sm:$0xf]
    %v83 = vld [vmem:[#allocation3 + $0xa0] sm:$0xf]
    %v84 = vld [vmem:[#allocation3 + $0xa4] sm:$0xf]
    %v85 = vld [vmem:[#allocation3 + $0xa8] sm:$0xf]
    %v86 = vld [vmem:[#allocation3 + $0xac] sm:$0xf]
    %v87 = vld [vmem:[#allocation3 + $0xb0] sm:$0xf]
    %v88 = vld [vmem:[#allocation3 + $0xb4] sm:$0xf]
    %v89 = vld [vmem:[#allocation3 + $0xb8] sm:$0xf]
    %v90 = vld [vmem:[#allocation3 + $0xbc] sm:$0xf]
    %v91 = vld [vmem:[#allocation3 + $0xc0] sm:$0xf]
    %v92 = vld [vmem:[#allocation3 + $0xc4] sm:$0xf]
    %v93 = vld [vmem:[#allocation3 + $0xc8] sm:$0xf]
    %v94 = vld [vmem:[#allocation3 + $0xcc] sm:$0xf]
    %v95 = vld [vmem:[#allocation3 + $0xd0] sm:$0xf]
    %v96 = vld [vmem:[#allocation3 + $0xd4] sm:$0xf]
    %v97 = vld [vmem:[#allocation3 + $0xd8] sm:$0xf]
    %v98 = vld [vmem:[#allocation3 + $0xdc] sm:$0xf]
    %v99 = vld [vmem:[#allocation3 + $0xe0] sm:$0xf]
    %v100 = vld [vmem:[#allocation3 + $0xe4] sm:$0xf]
    %v101 = vld [vmem:[#allocation3 + $0xe8] sm:$0xf]
    %v102 = vld [vmem:[#allocation3 + $0xec] sm:$0xf]
    %v103 = vld [vmem:[#allocation3 + $0xf0] sm:$0xf]
    %v104 = vld [vmem:[#allocation3 + $0xf4] sm:$0xf]
    %v105 = vld [vmem:[#allocation3 + $0xf8] sm:$0xf]
    %v106 = vld [vmem:[#allocation3 + $0xfc] sm:$0xf]
    %v107 = vld [vmem:[#allocation3 + $0x100] sm:$0xf]
    %v108 = vld [vmem:[#allocation3 + $0x104] sm:$0xf]
    %v109 = vld [vmem:[#allocation3 + $0x108] sm:$0xf]
    %v110 = vld [vmem:[#allocation3 + $0x10c] sm:$0xf]
    %v111 = vld [vmem:[#allocation3 + $0x110] sm:$0xf]
    %v112 = vld [vmem:[#allocation3 + $0x114] sm:$0xf]
    %v113 = vld [vmem:[#allocation3 + $0x118] sm:$0xf]
    %v114 = vld [vmem:[#allocation3 + $0x11c] sm:$0xf]
    %v115 = vld [vmem:[%s2] sm:$0x1]
    %v117 = vlaneseq
    %v118 = vshrl.u32 %v117, 7
    %v119 = vsub.s32 0, %v118
    %v120 = vrot.slane %v115, %v119
    %v125 = vunpack.c.l.b16 %v40
    %v126 = vunpack.c.h.b16 %v40
    %v127 = vunpack.c.l.b16 %v41
    %v128 = vunpack.c.h.b16 %v41
    %v129 = vunpack.c.l.b16 %v42
    %v130 = vpack.c.b16 %v125, %v125
    %v131 = vpack.c.b16 %v126, %v126
    %v132 = vpack.c.b16 %v127, %v127
    %v133 = vpack.c.b16 %v128, %v128
    %v134 = vpack.c.b16 %v129, %v129
    %v211 = vunpack.c.l.b16 %v43
    %v212 = vunpack.c.l.b16 %v44
    %v213 = vunpack.c.l.b16 %v45
    %v214 = vunpack.c.l.b16 %v46
    %v215 = vunpack.c.l.b16 %v47
    %v216 = vunpack.c.l.b16 %v48
    %v217 = vunpack.c.l.b16 %v49
    %v218 = vunpack.c.l.b16 %v50
    %v219 = vunpack.c.l.b16 %v51
    %v220 = vunpack.c.l.b16 %v52
    %v221 = vunpack.c.l.b16 %v53
    %v222 = vunpack.c.l.b16 %v54
    %v223 = vunpack.c.l.b16 %v55
    %v224 = vunpack.c.l.b16 %v56
    %v225 = vunpack.c.l.b16 %v57
    %v226 = vunpack.c.l.b16 %v58
    %v227 = vunpack.c.l.b16 %v59
    %v228 = vunpack.c.l.b16 %v60
    %v229 = vunpack.c.l.b16 %v61
    %v230 = vunpack.c.l.b16 %v62
    %v231 = vunpack.c.l.b16 %v63
    %v232 = vunpack.c.l.b16 %v64
    %v233 = vunpack.c.l.b16 %v65
    %v234 = vunpack.c.l.b16 %v66
    %v235 = vunpack.c.l.b16 %v67
    %v236 = vunpack.c.l.b16 %v68
    %v237 = vunpack.c.l.b16 %v69
    %v238 = vunpack.c.l.b16 %v70
    %v239 = vunpack.c.l.b16 %v71
    %v240 = vunpack.c.l.b16 %v72
    %v241 = vunpack.c.l.b16 %v73
    %v242 = vunpack.c.l.b16 %v74
    %v243 = vunpack.c.l.b16 %v75
    %v244 = vunpack.c.l.b16 %v76
    %v245 = vunpack.c.l.b16 %v77
    %v246 = vunpack.c.l.b16 %v78
    %v247 = vunpack.c.l.b16 %v79
    %v248 = vunpack.c.l.b16 %v80
    %v249 = vunpack.c.l.b16 %v81
    %v250 = vunpack.c.l.b16 %v82
    %v251 = vunpack.c.l.b16 %v83
    %v252 = vunpack.c.l.b16 %v84
    %v253 = vunpack.c.l.b16 %v85
    %v254 = vunpack.c.l.b16 %v86
    %v255 = vunpack.c.l.b16 %v87
    %v256 = vunpack.c.l.b16 %v88
    %v257 = vunpack.c.l.b16 %v89
    %v258 = vunpack.c.l.b16 %v90
    %v259 = vunpack.c.l.b16 %v91
    %v260 = vunpack.c.l.b16 %v92
    %v261 = vunpack.c.l.b16 %v93
    %v262 = vunpack.c.l.b16 %v94
    %v263 = vunpack.c.l.b16 %v95
    %v264 = vunpack.c.l.b16 %v96
    %v265 = vunpack.c.l.b16 %v97
    %v266 = vunpack.c.l.b16 %v98
    %v267 = vunpack.c.l.b16 %v99
    %v268 = vunpack.c.l.b16 %v100
    %v269 = vunpack.c.l.b16 %v101
    %v270 = vunpack.c.l.b16 %v102
    %v271 = vunpack.c.l.b16 %v103
    %v272 = vunpack.c.l.b16 %v104
    %v273 = vunpack.c.l.b16 %v105
    %v274 = vunpack.c.l.b16 %v106
    %v275 = vunpack.c.l.b16 %v107
    %v276 = vunpack.c.l.b16 %v108
    %v277 = vunpack.c.l.b16 %v109
    %v278 = vunpack.c.l.b16 %v110
    %v279 = vunpack.c.l.b16 %v111
    %v280 = vunpack.c.l.b16 %v112
    %v281 = vunpack.c.l.b16 %v113
    %v282 = vunpack.c.l.b16 %v114
    %v283 = vpack.c.b16 %v212, %v211
    %v284 = vpack.c.b16 %v214, %v213
    %v285 = vpack.c.b16 %v216, %v215
    %v286 = vpack.c.b16 %v218, %v217
    %v287 = vpack.c.b16 %v220, %v219
    %v288 = vpack.c.b16 %v222, %v221
    %v289 = vpack.c.b16 %v224, %v223
    %v290 = vpack.c.b16 %v226, %v225
    %v291 = vpack.c.b16 %v228, %v227
    %v292 = vpack.c.b16 %v230, %v229
    %v293 = vpack.c.b16 %v232, %v231
    %v294 = vpack.c.b16 %v234, %v233
    %v295 = vpack.c.b16 %v236, %v235
    %v296 = vpack.c.b16 %v238, %v237
    %v297 = vpack.c.b16 %v240, %v239
    %v298 = vpack.c.b16 %v242, %v241
    %v299 = vpack.c.b16 %v244, %v243
    %v300 = vpack.c.b16 %v246, %v245
    %v301 = vpack.c.b16 %v248, %v247
    %v302 = vpack.c.b16 %v250, %v249
    %v303 = vpack.c.b16 %v252, %v251
    %v304 = vpack.c.b16 %v254, %v253
    %v305 = vpack.c.b16 %v256, %v255
    %v306 = vpack.c.b16 %v258, %v257
    %v307 = vpack.c.b16 %v260, %v259
    %v308 = vpack.c.b16 %v262, %v261
    %v309 = vpack.c.b16 %v264, %v263
    %v310 = vpack.c.b16 %v266, %v265
    %v311 = vpack.c.b16 %v268, %v267
    %v312 = vpack.c.b16 %v270, %v269
    %v313 = vpack.c.b16 %v272, %v271
    %v314 = vpack.c.b16 %v274, %v273
    %v315 = vpack.c.b16 %v276, %v275
    %v316 = vpack.c.b16 %v278, %v277
    %v317 = vpack.c.b16 %v280, %v279
    %v318 = vpack.c.b16 %v282, %v281
    %vm355 = vcmask 523264
    %v357 = vsel %vm355, %v134, 0
    %359 = vmatprep.subr.bf16.mxu0 0
    %360 = vmatpush1.bf16.msra.mxu0 %v283
    %361 = vmatprep.subr.bf16.mxu0 0
    %362 = vmatpush1.bf16.msra.mxu0 %v284
    %363 = vmatprep.subr.bf16.mxu0 0
    %364 = vmatpush1.bf16.msra.mxu0 %v285
    %365 = vmatprep.subr.bf16.mxu0 0
    %366 = vmatpush1.bf16.msra.mxu0 %v286
    %367 = vmatprep.subr.bf16.mxu0 0
    %368 = vmatpush1.bf16.msra.mxu0 %v287
    %369 = vmatprep.subr.bf16.mxu0 0
    %370 = vmatpush1.bf16.msra.mxu0 %v288
    %371 = vmatprep.subr.bf16.mxu0 0
    %372 = vmatpush1.bf16.msra.mxu0 %v289
    %373 = vmatprep.subr.bf16.mxu0 0
    %374 = vmatpush1.bf16.msra.mxu0 %v290
    %375 = vmatprep.subr.bf16.mxu0 0
    %376 = vmatpush1.bf16.msra.mxu0 %v291
    %377 = vmatprep.subr.bf16.mxu0 0
    %378 = vmatpush1.bf16.msra.mxu0 %v292
    %379 = vmatprep.subr.bf16.mxu0 0
    %380 = vmatpush1.bf16.msra.mxu0 %v293
    %381 = vmatprep.subr.bf16.mxu0 0
    %382 = vmatpush1.bf16.msra.mxu0 %v294
    %383 = vmatprep.subr.bf16.mxu0 0
    %384 = vmatpush1.bf16.msra.mxu0 %v295
    %385 = vmatprep.subr.bf16.mxu0 0
    %386 = vmatpush1.bf16.msra.mxu0 %v296
    %387 = vmatprep.subr.bf16.mxu0 0
    %388 = vmatpush1.bf16.msra.mxu0 %v297
    %389 = vmatprep.subr.bf16.mxu0 0
    %390 = vmatpush1.bf16.msra.mxu0 %v298
    %391 = vmatprep.mubr.bf16.mxu0 %v131
    %392 = vmatmul.mubr.bf16.gmra.mrb[0].mxu0 %v130
    %v393 = vpop.f32.mrb[0].mxu0
    %v394 = vadd.f32 %v120, %v393
    %v395 = vpop.f32.mrb[0].mxu0
    %v396 = vpop.f32.mrb[0].mxu0
    %v397 = vpop.f32.mrb[0].mxu0
    %398 = vdwg.mxu0
    %399 = vmatprep.subr.bf16.mxu0 0
    %400 = vmatpush1.bf16.msra.mxu0 %v299
    %401 = vmatprep.subr.bf16.mxu0 0
    %402 = vmatpush1.bf16.msra.mxu0 %v300
    %403 = vmatprep.subr.bf16.mxu0 0
    %404 = vmatpush1.bf16.msra.mxu0 %v301
    %405 = vmatprep.subr.bf16.mxu0 0
    %406 = vmatpush1.bf16.msra.mxu0 %v302
    %407 = vmatprep.subr.bf16.mxu0 0
    %408 = vmatpush1.bf16.msra.mxu0 %v303
    %409 = vmatprep.subr.bf16.mxu0 0
    %410 = vmatpush1.bf16.msra.mxu0 %v304
    %411 = vmatprep.subr.bf16.mxu0 0
    %412 = vmatpush1.bf16.msra.mxu0 %v305
    %413 = vmatprep.subr.bf16.mxu0 0
    %414 = vmatpush1.bf16.msra.mxu0 %v306
    %415 = vmatprep.subr.bf16.mxu0 0
    %416 = vmatpush1.bf16.msra.mxu0 %v307
    %417 = vmatprep.subr.bf16.mxu0 0
    %418 = vmatpush1.bf16.msra.mxu0 %v308
    %419 = vmatprep.subr.bf16.mxu0 0
    %420 = vmatpush1.bf16.msra.mxu0 %v309
    %421 = vmatprep.subr.bf16.mxu0 0
    %422 = vmatpush1.bf16.msra.mxu0 %v310
    %423 = vmatprep.subr.bf16.mxu0 0
    %424 = vmatpush1.bf16.msra.mxu0 %v311
    %425 = vmatprep.subr.bf16.mxu0 0
    %426 = vmatpush1.bf16.msra.mxu0 %v312
    %427 = vmatprep.subr.bf16.mxu0 0
    %428 = vmatpush1.bf16.msra.mxu0 %v313
    %429 = vmatprep.subr.bf16.mxu0 0
    %430 = vmatpush1.bf16.msra.mxu0 %v314
    %431 = vmatprep.mubr.bf16.mxu0 %v133
    %432 = vmatmul.mubr.bf16.gmra.mrb[0].mxu0 %v132
    %v433 = vpop.f32.mrb[0].mxu0
    %v434 = vadd.f32 %v394, %v433
    %v435 = vpop.f32.mrb[0].mxu0
    %v436 = vpop.f32.mrb[0].mxu0
    %v437 = vpop.f32.mrb[0].mxu0
    %438 = vdwg.mxu0
    %439 = vmatprep.subr.bf16.mxu0 0
    %440 = vmatpush1.bf16.msra.mxu0 %v315
    %441 = vmatprep.subr.bf16.mxu0 0
    %442 = vmatpush1.bf16.msra.mxu0 %v316
    %443 = vmatprep.subr.bf16.mxu0 0
    %444 = vmatpush1.bf16.msra.mxu0 %v317
    %445 = vmatprep.subr.bf16.mxu0 0
    %446 = vmatpush1.bf16.msra.mxu0 %v318
    %447 = vmatprep.subr.bf16.mxu0 0
    %448 = vmatpush1.bf16.msra.mxu0 0
    %449 = vmatprep.subr.bf16.mxu0 0
    %450 = vmatpush1.bf16.msra.mxu0 0
    %451 = vmatprep.subr.bf16.mxu0 0
    %452 = vmatpush1.bf16.msra.mxu0 0
    %453 = vmatprep.subr.bf16.mxu0 0
    %454 = vmatpush1.bf16.msra.mxu0 0
    %455 = vmatprep.subr.bf16.mxu0 0
    %456 = vmatpush1.bf16.msra.mxu0 0
    %457 = vmatprep.subr.bf16.mxu0 0
    %458 = vmatpush1.bf16.msra.mxu0 0
    %459 = vmatprep.subr.bf16.mxu0 0
    %460 = vmatpush1.bf16.msra.mxu0 0
    %461 = vmatprep.subr.bf16.mxu0 0
    %462 = vmatpush1.bf16.msra.mxu0 0
    %463 = vmatprep.subr.bf16.mxu0 0
    %464 = vmatpush1.bf16.msra.mxu0 0
    %465 = vmatprep.subr.bf16.mxu0 0
    %466 = vmatpush1.bf16.msra.mxu0 0
    %467 = vmatprep.subr.bf16.mxu0 0
    %468 = vmatpush1.bf16.msra.mxu0 0
    %469 = vmatprep.subr.bf16.mxu0 0
    %470 = vmatpush1.bf16.msra.mxu0 0
    %471 = vmatprep.mubr.bf16.mxu0 0
    %472 = vmatmul.mubr.bf16.gmra.mrb[0].mxu0 %v357
    %v473 = vpop.f32.mrb[0].mxu0
    %v474 = vadd.f32 %v434, %v473
    %v475 = vpop.f32.mrb[0].mxu0
    %v476 = vpop.f32.mrb[0].mxu0
    %v477 = vpop.f32.mrb[0].mxu0
    %478 = vdwg.mxu0
    %v479 = vld [vmem:[%s3] sm:$0xf]
    %v480 = vld [vmem:[%s3 + $0x4] sm:$0xf]
    %v481 = vld [vmem:[%s3 + $0x8] sm:$0xf]
    %v482 = vld [vmem:[%s3 + $0xc] sm:$0xf]
    %v483 = vld [vmem:[%s3 + $0x10] sm:$0xf]
    %v484 = vld [vmem:[%s3 + $0x14] sm:$0xf]
    %v485 = vld [vmem:[%s3 + $0x18] sm:$0xf]
    %v486 = vld [vmem:[%s3 + $0x1c] sm:$0xf]
    %v487 = vld [vmem:[%s3 + $0x20] sm:$0xf]
    %v488 = vld [vmem:[%s3 + $0x24] sm:$0xf]
    %v489 = vld [vmem:[%s3 + $0x28] sm:$0xf]
    %v490 = vld [vmem:[%s3 + $0x2c] sm:$0xf]
    %v491 = vld [vmem:[%s3 + $0x30] sm:$0xf]
    %v492 = vld [vmem:[%s3 + $0x34] sm:$0xf]
    %v493 = vld [vmem:[%s3 + $0x38] sm:$0xf]
    %v494 = vld [vmem:[%s3 + $0x3c] sm:$0xf]
    %v511 = vunpack.c.l.b16 %v479
    %v512 = vunpack.c.l.b16 %v480
    %v513 = vunpack.c.l.b16 %v481
    %v514 = vunpack.c.l.b16 %v482
    %v515 = vunpack.c.l.b16 %v483
    %v516 = vunpack.c.l.b16 %v484
    %v517 = vunpack.c.l.b16 %v485
    %v518 = vunpack.c.l.b16 %v486
    %v519 = vunpack.c.l.b16 %v487
    %v520 = vunpack.c.l.b16 %v488
    %v521 = vunpack.c.l.b16 %v489
    %v522 = vunpack.c.l.b16 %v490
    %v523 = vunpack.c.l.b16 %v491
    %v524 = vunpack.c.l.b16 %v492
    %v525 = vunpack.c.l.b16 %v493
    %v526 = vunpack.c.l.b16 %v494
    %v527 = vpack.c.b16 %v512, %v511
    %v528 = vpack.c.b16 %v514, %v513
    %v529 = vpack.c.b16 %v516, %v515
    %v530 = vpack.c.b16 %v518, %v517
    %v531 = vpack.c.b16 %v520, %v519
    %v532 = vpack.c.b16 %v522, %v521
    %v533 = vpack.c.b16 %v524, %v523
    %v534 = vpack.c.b16 %v526, %v525
    %543 = vmatprep.subr.bf16.mxu0 0
    %544 = vmatpush1.bf16.msra.mxu0 %v527
    %545 = vmatprep.subr.bf16.mxu0 0
    %546 = vmatpush1.bf16.msra.mxu0 %v528
    %547 = vmatprep.subr.bf16.mxu0 0
    %548 = vmatpush1.bf16.msra.mxu0 %v529
    %549 = vmatprep.subr.bf16.mxu0 0
    %550 = vmatpush1.bf16.msra.mxu0 %v530
    %551 = vmatprep.subr.bf16.mxu0 0
    %552 = vmatpush1.bf16.msra.mxu0 %v531
    %553 = vmatprep.subr.bf16.mxu0 0
    %554 = vmatpush1.bf16.msra.mxu0 %v532
    %555 = vmatprep.subr.bf16.mxu0 0
    %556 = vmatpush1.bf16.msra.mxu0 %v533
    %557 = vmatprep.subr.bf16.mxu0 0
    %558 = vmatpush1.bf16.msra.mxu0 %v534
    %559 = vmatprep.subr.bf16.mxu0 0
    %560 = vmatpush1.bf16.msra.mxu0 0
    %561 = vmatprep.subr.bf16.mxu0 0
    %562 = vmatpush1.bf16.msra.mxu0 0
    %563 = vmatprep.subr.bf16.mxu0 0
    %564 = vmatpush1.bf16.msra.mxu0 0
    %565 = vmatprep.subr.bf16.mxu0 0
    %566 = vmatpush1.bf16.msra.mxu0 0
    %567 = vmatprep.subr.bf16.mxu0 0
    %568 = vmatpush1.bf16.msra.mxu0 0
    %569 = vmatprep.subr.bf16.mxu0 0
    %570 = vmatpush1.bf16.msra.mxu0 0
    %571 = vmatprep.subr.bf16.mxu0 0
    %572 = vmatpush1.bf16.msra.mxu0 0
    %573 = vmatprep.subr.bf16.mxu0 0
    %574 = vmatpush1.bf16.msra.mxu0 0
    %575 = vmatprep.mubr.bf16.mxu0 0
    %576 = vmatmul.mubr.bf16.gmra.mrb[0].mxu0 0
    %v577 = vpop.f32.mrb[0].mxu0
    %v578 = vadd.f32 0.0, %v577
    %v579 = vpop.f32.mrb[0].mxu0
    %v580 = vpop.f32.mrb[0].mxu0
    %v581 = vpop.f32.mrb[0].mxu0
    %582 = vdwg.mxu0
    %v583 = vadd.f32 %v474, %v578
    %v584 = vmax.f32 %v583, 0.0
    %585 = vst [vmem:[#allocation2] sm:$0x1] %v584
    %v586 = vpack.c.bf16 %v584, %v584
    %587 = vmatprep.subr.bf16.mxu0 0
    %588 = vmatpush1.bf16.msra.mxu0 %v527
    %589 = vmatprep.subr.bf16.mxu0 0
    %590 = vmatpush1.bf16.msra.mxu0 %v528
    %591 = vmatprep.subr.bf16.mxu0 0
    %592 = vmatpush1.bf16.msra.mxu0 %v529
    %593 = vmatprep.subr.bf16.mxu0 0
    %594 = vmatpush1.bf16.msra.mxu0 %v530
    %595 = vmatprep.subr.bf16.mxu0 0
    %596 = vmatpush1.bf16.msra.mxu0 %v531
    %597 = vmatprep.subr.bf16.mxu0 0
    %598 = vmatpush1.bf16.msra.mxu0 %v532
    %599 = vmatprep.subr.bf16.mxu0 0
    %600 = vmatpush1.bf16.msra.mxu0 %v533
    %601 = vmatprep.subr.bf16.mxu0 0
    %602 = vmatpush1.bf16.msra.mxu0 %v534
    %603 = vmatprep.subr.bf16.mxu0 0
    %604 = vmatpush1.bf16.msra.mxu0 0
    %605 = vmatprep.subr.bf16.mxu0 0
    %606 = vmatpush1.bf16.msra.mxu0 0
    %607 = vmatprep.subr.bf16.mxu0 0
    %608 = vmatpush1.bf16.msra.mxu0 0
    %609 = vmatprep.subr.bf16.mxu0 0
    %610 = vmatpush1.bf16.msra.mxu0 0
    %611 = vmatprep.subr.bf16.mxu0 0
    %612 = vmatpush1.bf16.msra.mxu0 0
    %613 = vmatprep.subr.bf16.mxu0 0
    %614 = vmatpush1.bf16.msra.mxu0 0
    %615 = vmatprep.subr.bf16.mxu0 0
    %616 = vmatpush1.bf16.msra.mxu0 0
    %617 = vmatprep.subr.bf16.mxu0 0
    %618 = vmatpush1.bf16.msra.mxu0 0
    %619 = vmatprep.mubr.bf16.mxu0 0
    %620 = vmatmul.mubr.bf16.gmra.mrb[0].mxu0 %v586
    %v621 = vpop.f32.mrb[0].mxu0
    %v622 = vadd.f32 0.0, %v621
    %v623 = vpop.f32.mrb[0].mxu0
    %v624 = vpop.f32.mrb[0].mxu0
    %v625 = vpop.f32.mrb[0].mxu0
    %626 = vdwg.mxu0
    %v628 = vrot.slane %v622, 7
    %v630 = vadd.f32 %v474, %v628
    %v631 = vmax.f32 %v630, 0.0
    %632 = vst [vmem:[#allocation2] sm:$0x2] %v631
    %v633 = vpack.c.bf16 %v631, %v631
    %v635 = vshrl.u32 %v633, 16
    %638 = vmatprep.subr.bf16.mxu0 0
    %639 = vmatpush1.bf16.msra.mxu0 %v527
    %640 = vmatprep.subr.bf16.mxu0 0
    %641 = vmatpush1.bf16.msra.mxu0 %v528
    %642 = vmatprep.subr.bf16.mxu0 0
    %643 = vmatpush1.bf16.msra.mxu0 %v529
    %644 = vmatprep.subr.bf16.mxu0 0
    %645 = vmatpush1.bf16.msra.mxu0 %v530
    %646 = vmatprep.subr.bf16.mxu0 0
    %647 = vmatpush1.bf16.msra.mxu0 %v531
    %648 = vmatprep.subr.bf16.mxu0 0
    %649 = vmatpush1.bf16.msra.mxu0 %v532
    %650 = vmatprep.subr.bf16.mxu0 0
    %651 = vmatpush1.bf16.msra.mxu0 %v533
    %652 = vmatprep.subr.bf16.mxu0 0
    %653 = vmatpush1.bf16.msra.mxu0 %v534
    %654 = vmatprep.subr.bf16.mxu0 0
    %655 = vmatpush1.bf16.msra.mxu0 0
    %656 = vmatprep.subr.bf16.mxu0 0
    %657 = vmatpush1.bf16.msra.mxu0 0
    %658 = vmatprep.subr.bf16.mxu0 0
    %659 = vmatpush1.bf16.msra.mxu0 0
    %660 = vmatprep.subr.bf16.mxu0 0
    %661 = vmatpush1.bf16.msra.mxu0 0
    %662 = vmatprep.subr.bf16.mxu0 0
    %663 = vmatpush1.bf16.msra.mxu0 0
    %664 = vmatprep.subr.bf16.mxu0 0
    %665 = vmatpush1.bf16.msra.mxu0 0
    %666 = vmatprep.subr.bf16.mxu0 0
    %667 = vmatpush1.bf16.msra.mxu0 0
    %668 = vmatprep.subr.bf16.mxu0 0
    %669 = vmatpush1.bf16.msra.mxu0 0
    %670 = vmatprep.mubr.bf16.mxu0 0
    %671 = vmatmul.mubr.bf16.gmra.mrb[0].mxu0 %v635
    %v672 = vpop.f32.mrb[0].mxu0
    %v673 = vadd.f32 0.0, %v672
    %v674 = vpop.f32.mrb[0].mxu0
    %v675 = vpop.f32.mrb[0].mxu0
    %v676 = vpop.f32.mrb[0].mxu0
    %677 = vdwg.mxu0
    %v679 = vrot.slane %v673, 6
    %v681 = vadd.f32 %v474, %v679
    %v682 = vmax.f32 %v681, 0.0
    %683 = vst [vmem:[#allocation2] sm:$0x4] %v682
    %v684 = vpack.c.bf16 %v682, %v682
    %v686 = vrot.slane %v684, 1
    %688 = vmatprep.subr.bf16.mxu0 0
    %689 = vmatpush1.bf16.msra.mxu0 %v527
    %690 = vmatprep.subr.bf16.mxu0 0
    %691 = vmatpush1.bf16.msra.mxu0 %v528
    %692 = vmatprep.subr.bf16.mxu0 0
    %693 = vmatpush1.bf16.msra.mxu0 %v529
    %694 = vmatprep.subr.bf16.mxu0 0
    %695 = vmatpush1.bf16.msra.mxu0 %v530
    %696 = vmatprep.subr.bf16.mxu0 0
    %697 = vmatpush1.bf16.msra.mxu0 %v531
    %698 = vmatprep.subr.bf16.mxu0 0
    %699 = vmatpush1.bf16.msra.mxu0 %v532
    %700 = vmatprep.subr.bf16.mxu0 0
    %701 = vmatpush1.bf16.msra.mxu0 %v533
    %702 = vmatprep.subr.bf16.mxu0 0
    %703 = vmatpush1.bf16.msra.mxu0 %v534
    %704 = vmatprep.subr.bf16.mxu0 0
    %705 = vmatpush1.bf16.msra.mxu0 0
    %706 = vmatprep.subr.bf16.mxu0 0
    %707 = vmatpush1.bf16.msra.mxu0 0
    %708 = vmatprep.subr.bf16.mxu0 0
    %709 = vmatpush1.bf16.msra.mxu0 0
    %710 = vmatprep.subr.bf16.mxu0 0
    %711 = vmatpush1.bf16.msra.mxu0 0
    %712 = vmatprep.subr.bf16.mxu0 0
    %713 = vmatpush1.bf16.msra.mxu0 0
    %714 = vmatprep.subr.bf16.mxu0 0
    %715 = vmatpush1.bf16.msra.mxu0 0
    %716 = vmatprep.subr.bf16.mxu0 0
    %717 = vmatpush1.bf16.msra.mxu0 0
    %718 = vmatprep.subr.bf16.mxu0 0
    %719 = vmatpush1.bf16.msra.mxu0 0
    %720 = vmatprep.mubr.bf16.mxu0 0
    %721 = vmatmul.mubr.bf16.gmra.mrb[0].mxu0 %v686
    %v722 = vpop.f32.mrb[0].mxu0
    %v723 = vadd.f32 0.0, %v722
    %v724 = vpop.f32.mrb[0].mxu0
    %v725 = vpop.f32.mrb[0].mxu0
    %v726 = vpop.f32.mrb[0].mxu0
    %727 = vdwg.mxu0
    %v729 = vrot.slane %v723, 5
    %v731 = vadd.f32 %v474, %v729
    %v732 = vmax.f32 %v731, 0.0
    %733 = vst [vmem:[#allocation2] sm:$0x8] %v732
    %v734 = vpack.c.bf16 %v732, %v732
    %v736 = vshrl.u32 %v734, 16
    %v738 = vrot.slane %v736, 1
    %740 = vmatprep.subr.bf16.mxu0 0
    %741 = vmatpush1.bf16.msra.mxu0 %v527
    %742 = vmatprep.subr.bf16.mxu0 0
    %743 = vmatpush1.bf16.msra.mxu0 %v528
    %744 = vmatprep.subr.bf16.mxu0 0
    %745 = vmatpush1.bf16.msra.mxu0 %v529
    %746 = vmatprep.subr.bf16.mxu0 0
    %747 = vmatpush1.bf16.msra.mxu0 %v530
    %748 = vmatprep.subr.bf16.mxu0 0
    %749 = vmatpush1.bf16.msra.mxu0 %v531
    %750 = vmatprep.subr.bf16.mxu0 0
    %751 = vmatpush1.bf16.msra.mxu0 %v532
    %752 = vmatprep.subr.bf16.mxu0 0
    %753 = vmatpush1.bf16.msra.mxu0 %v533
    %754 = vmatprep.subr.bf16.mxu0 0
    %755 = vmatpush1.bf16.msra.mxu0 %v534
    %756 = vmatprep.subr.bf16.mxu0 0
    %757 = vmatpush1.bf16.msra.mxu0 0
    %758 = vmatprep.subr.bf16.mxu0 0
    %759 = vmatpush1.bf16.msra.mxu0 0
    %760 = vmatprep.subr.bf16.mxu0 0
    %761 = vmatpush1.bf16.msra.mxu0 0
    %762 = vmatprep.subr.bf16.mxu0 0
    %763 = vmatpush1.bf16.msra.mxu0 0
    %764 = vmatprep.subr.bf16.mxu0 0
    %765 = vmatpush1.bf16.msra.mxu0 0
    %766 = vmatprep.subr.bf16.mxu0 0
    %767 = vmatpush1.bf16.msra.mxu0 0
    %768 = vmatprep.subr.bf16.mxu0 0
    %769 = vmatpush1.bf16.msra.mxu0 0
    %770 = vmatprep.subr.bf16.mxu0 0
    %771 = vmatpush1.bf16.msra.mxu0 0
    %772 = vmatprep.mubr.bf16.mxu0 0
    %773 = vmatmul.mubr.bf16.gmra.mrb[0].mxu0 %v738
    %v774 = vpop.f32.mrb[0].mxu0
    %v775 = vadd.f32 0.0, %v774
    %v776 = vpop.f32.mrb[0].mxu0
    %v777 = vpop.f32.mrb[0].mxu0
    %v778 = vpop.f32.mrb[0].mxu0
    %779 = vdwg.mxu0
    %v781 = vrot.slane %v775, 4
    %v783 = vadd.f32 %v474, %v781
    %v784 = vmax.f32 %v783, 0.0
    %785 = vst [vmem:[#allocation2] sm:$0x10] %v784
    %v786 = vpack.c.bf16 %v784, %v784
    %v788 = vrot.slane %v786, 2
    %790 = vmatprep.subr.bf16.mxu0 0
    %791 = vmatpush1.bf16.msra.mxu0 %v527
    %792 = vmatprep.subr.bf16.mxu0 0
    %793 = vmatpush1.bf16.msra.mxu0 %v528
    %794 = vmatprep.subr.bf16.mxu0 0
    %795 = vmatpush1.bf16.msra.mxu0 %v529
    %796 = vmatprep.subr.bf16.mxu0 0
    %797 = vmatpush1.bf16.msra.mxu0 %v530
    %798 = vmatprep.subr.bf16.mxu0 0
    %799 = vmatpush1.bf16.msra.mxu0 %v531
    %800 = vmatprep.subr.bf16.mxu0 0
    %801 = vmatpush1.bf16.msra.mxu0 %v532
    %802 = vmatprep.subr.bf16.mxu0 0
    %803 = vmatpush1.bf16.msra.mxu0 %v533
    %804 = vmatprep.subr.bf16.mxu0 0
    %805 = vmatpush1.bf16.msra.mxu0 %v534
    %806 = vmatprep.subr.bf16.mxu0 0
    %807 = vmatpush1.bf16.msra.mxu0 0
    %808 = vmatprep.subr.bf16.mxu0 0
    %809 = vmatpush1.bf16.msra.mxu0 0
    %810 = vmatprep.subr.bf16.mxu0 0
    %811 = vmatpush1.bf16.msra.mxu0 0
    %812 = vmatprep.subr.bf16.mxu0 0
    %813 = vmatpush1.bf16.msra.mxu0 0
    %814 = vmatprep.subr.bf16.mxu0 0
    %815 = vmatpush1.bf16.msra.mxu0 0
    %816 = vmatprep.subr.bf16.mxu0 0
    %817 = vmatpush1.bf16.msra.mxu0 0
    %818 = vmatprep.subr.bf16.mxu0 0
    %819 = vmatpush1.bf16.msra.mxu0 0
    %820 = vmatprep.subr.bf16.mxu0 0
    %821 = vmatpush1.bf16.msra.mxu0 0
    %822 = vmatprep.mubr.bf16.mxu0 0
    %823 = vmatmul.mubr.bf16.gmra.mrb[0].mxu0 %v788
    %v824 = vpop.f32.mrb[0].mxu0
    %v825 = vadd.f32 0.0, %v824
    %v826 = vpop.f32.mrb[0].mxu0
    %v827 = vpop.f32.mrb[0].mxu0
    %v828 = vpop.f32.mrb[0].mxu0
    %829 = vdwg.mxu0
    %v831 = vrot.slane %v825, 3
    %v833 = vadd.f32 %v474, %v831
    %v834 = vmax.f32 %v833, 0.0
    %835 = vst [vmem:[#allocation2] sm:$0x20] %v834
    %v836 = vpack.c.bf16 %v834, %v834
    %v838 = vshrl.u32 %v836, 16
    %v840 = vrot.slane %v838, 2
    %842 = vmatprep.subr.bf16.mxu0 0
    %843 = vmatpush1.bf16.msra.mxu0 %v527
    %844 = vmatprep.subr.bf16.mxu0 0
    %845 = vmatpush1.bf16.msra.mxu0 %v528
    %846 = vmatprep.subr.bf16.mxu0 0
    %847 = vmatpush1.bf16.msra.mxu0 %v529
    %848 = vmatprep.subr.bf16.mxu0 0
    %849 = vmatpush1.bf16.msra.mxu0 %v530
    %850 = vmatprep.subr.bf16.mxu0 0
    %851 = vmatpush1.bf16.msra.mxu0 %v531
    %852 = vmatprep.subr.bf16.mxu0 0
    %853 = vmatpush1.bf16.msra.mxu0 %v532
    %854 = vmatprep.subr.bf16.mxu0 0
    %855 = vmatpush1.bf16.msra.mxu0 %v533
    %856 = vmatprep.subr.bf16.mxu0 0
    %857 = vmatpush1.bf16.msra.mxu0 %v534
    %858 = vmatprep.subr.bf16.mxu0 0
    %859 = vmatpush1.bf16.msra.mxu0 0
    %860 = vmatprep.subr.bf16.mxu0 0
    %861 = vmatpush1.bf16.msra.mxu0 0
    %862 = vmatprep.subr.bf16.mxu0 0
    %863 = vmatpush1.bf16.msra.mxu0 0
    %864 = vmatprep.subr.bf16.mxu0 0
    %865 = vmatpush1.bf16.msra.mxu0 0
    %866 = vmatprep.subr.bf16.mxu0 0
    %867 = vmatpush1.bf16.msra.mxu0 0
    %868 = vmatprep.subr.bf16.mxu0 0
    %869 = vmatpush1.bf16.msra.mxu0 0
    %870 = vmatprep.subr.bf16.mxu0 0
    %871 = vmatpush1.bf16.msra.mxu0 0
    %872 = vmatprep.subr.bf16.mxu0 0
    %873 = vmatpush1.bf16.msra.mxu0 0
    %874 = vmatprep.mubr.bf16.mxu0 0
    %875 = vmatmul.mubr.bf16.gmra.mrb[0].mxu0 %v840
    %v876 = vpop.f32.mrb[0].mxu0
    %v877 = vadd.f32 0.0, %v876
    %v878 = vpop.f32.mrb[0].mxu0
    %v879 = vpop.f32.mrb[0].mxu0
    %v880 = vpop.f32.mrb[0].mxu0
    %881 = vdwg.mxu0
    %v883 = vrot.slane %v877, 2
    %v885 = vadd.f32 %v474, %v883
    %v886 = vmax.f32 %v885, 0.0
    %887 = vst [vmem:[#allocation2] sm:$0x40] %v886
    %v888 = vpack.c.bf16 %v886, %v886
    %v890 = vrot.slane %v888, 3
    %892 = vmatprep.subr.bf16.mxu0 0
    %893 = vmatpush1.bf16.msra.mxu0 %v527
    %894 = vmatprep.subr.bf16.mxu0 0
    %895 = vmatpush1.bf16.msra.mxu0 %v528
    %896 = vmatprep.subr.bf16.mxu0 0
    %897 = vmatpush1.bf16.msra.mxu0 %v529
    %898 = vmatprep.subr.bf16.mxu0 0
    %899 = vmatpush1.bf16.msra.mxu0 %v530
    %900 = vmatprep.subr.bf16.mxu0 0
    %901 = vmatpush1.bf16.msra.mxu0 %v531
    %902 = vmatprep.subr.bf16.mxu0 0
    %903 = vmatpush1.bf16.msra.mxu0 %v532
    %904 = vmatprep.subr.bf16.mxu0 0
    %905 = vmatpush1.bf16.msra.mxu0 %v533
    %906 = vmatprep.subr.bf16.mxu0 0
    %907 = vmatpush1.bf16.msra.mxu0 %v534
    %908 = vmatprep.subr.bf16.mxu0 0
    %909 = vmatpush1.bf16.msra.mxu0 0
    %910 = vmatprep.subr.bf16.mxu0 0
    %911 = vmatpush1.bf16.msra.mxu0 0
    %912 = vmatprep.subr.bf16.mxu0 0
    %913 = vmatpush1.bf16.msra.mxu0 0
    %914 = vmatprep.subr.bf16.mxu0 0
    %915 = vmatpush1.bf16.msra.mxu0 0
    %916 = vmatprep.subr.bf16.mxu0 0
    %917 = vmatpush1.bf16.msra.mxu0 0
    %918 = vmatprep.subr.bf16.mxu0 0
    %919 = vmatpush1.bf16.msra.mxu0 0
    %920 = vmatprep.subr.bf16.mxu0 0
    %921 = vmatpush1.bf16.msra.mxu0 0
    %922 = vmatprep.subr.bf16.mxu0 0
    %923 = vmatpush1.bf16.msra.mxu0 0
    %924 = vmatprep.mubr.bf16.mxu0 0
    %925 = vmatmul.mubr.bf16.gmra.mrb[0].mxu0 %v890
    %v926 = vpop.f32.mrb[0].mxu0
    %v927 = vadd.f32 0.0, %v926
    %v928 = vpop.f32.mrb[0].mxu0
    %v929 = vpop.f32.mrb[0].mxu0
    %v930 = vpop.f32.mrb[0].mxu0
    %931 = vdwg.mxu0
    %v933 = vrot.slane %v927, 1
    %v935 = vadd.f32 %v474, %v933
    %v936 = vmax.f32 %v935, 0.0
    %937 = vst [vmem:[#allocation2] sm:$0x80] %v936
    %938 = vst [vmem:[%s7 - $0x7] sm:$0x80] %v936
    %v939 = vld [vmem:[#allocation2] sm:$0xff]
    %v940 = vpack.c.bf16 %v939, %v939
    %v941 = vld [vmem:[%s4] sm:$0xf]
    %v942 = vld [vmem:[%s4 + $0x4] sm:$0xf]
    %v943 = vld [vmem:[%s4 + $0x8] sm:$0xf]
    %v944 = vld [vmem:[%s4 + $0xc] sm:$0xf]
    %v945 = vld [vmem:[%s4 + $0x10] sm:$0xf]
    %v946 = vld [vmem:[%s4 + $0x14] sm:$0xf]
    %v947 = vld [vmem:[%s4 + $0x18] sm:$0xf]
    %v948 = vld [vmem:[%s4 + $0x1c] sm:$0xf]
    %v949 = vld [vmem:[%s4 + $0x20] sm:$0xf]
    %v950 = vld [vmem:[%s4 + $0x24] sm:$0xf]
    %v951 = vld [vmem:[%s4 + $0x28] sm:$0xf]
    %v952 = vld [vmem:[%s4 + $0x2c] sm:$0xf]
    %v953 = vld [vmem:[%s4 + $0x30] sm:$0xf]
    %v954 = vld [vmem:[%s4 + $0x34] sm:$0xf]
    %v955 = vld [vmem:[%s4 + $0x38] sm:$0xf]
    %v956 = vld [vmem:[%s4 + $0x3c] sm:$0xf]
    %v957 = vld [vmem:[%s5] sm:$0x1]
    %v959 = vlaneseq
    %v960 = vshrl.u32 %v959, 7
    %v961 = vsub.s32 0, %v960
    %v962 = vrot.slane %v957, %v961
    %v980 = vunpack.c.l.b16 %v941
    %v981 = vunpack.c.l.b16 %v942
    %v982 = vunpack.c.l.b16 %v943
    %v983 = vunpack.c.l.b16 %v944
    %v984 = vunpack.c.l.b16 %v945
    %v985 = vunpack.c.l.b16 %v946
    %v986 = vunpack.c.l.b16 %v947
    %v987 = vunpack.c.l.b16 %v948
    %v988 = vunpack.c.l.b16 %v949
    %v989 = vunpack.c.l.b16 %v950
    %v990 = vunpack.c.l.b16 %v951
    %v991 = vunpack.c.l.b16 %v952
    %v992 = vunpack.c.l.b16 %v953
    %v993 = vunpack.c.l.b16 %v954
    %v994 = vunpack.c.l.b16 %v955
    %v995 = vunpack.c.l.b16 %v956
    %v996 = vpack.c.b16 %v981, %v980
    %v997 = vpack.c.b16 %v983, %v982
    %v998 = vpack.c.b16 %v985, %v984
    %v999 = vpack.c.b16 %v987, %v986
    %v1000 = vpack.c.b16 %v989, %v988
    %v1001 = vpack.c.b16 %v991, %v990
    %v1002 = vpack.c.b16 %v993, %v992
    %v1003 = vpack.c.b16 %v995, %v994
    %1012 = vmatprep.subr.bf16.mxu0 0
    %1013 = vmatpush1.bf16.msra.mxu0 %v996
    %1014 = vmatprep.subr.bf16.mxu0 0
    %1015 = vmatpush1.bf16.msra.mxu0 %v997
    %1016 = vmatprep.subr.bf16.mxu0 0
    %1017 = vmatpush1.bf16.msra.mxu0 %v998
    %1018 = vmatprep.subr.bf16.mxu0 0
    %1019 = vmatpush1.bf16.msra.mxu0 %v999
    %1020 = vmatprep.subr.bf16.mxu0 0
    %1021 = vmatpush1.bf16.msra.mxu0 %v1000
    %1022 = vmatprep.subr.bf16.mxu0 0
    %1023 = vmatpush1.bf16.msra.mxu0 %v1001
    %1024 = vmatprep.subr.bf16.mxu0 0
    %1025 = vmatpush1.bf16.msra.mxu0 %v1002
    %1026 = vmatprep.subr.bf16.mxu0 0
    %1027 = vmatpush1.bf16.msra.mxu0 %v1003
    %1028 = vmatprep.subr.bf16.mxu0 0
    %1029 = vmatpush1.bf16.msra.mxu0 0
    %1030 = vmatprep.subr.bf16.mxu0 0
    %1031 = vmatpush1.bf16.msra.mxu0 0
    %1032 = vmatprep.subr.bf16.mxu0 0
    %1033 = vmatpush1.bf16.msra.mxu0 0
    %1034 = vmatprep.subr.bf16.mxu0 0
    %1035 = vmatpush1.bf16.msra.mxu0 0
    %1036 = vmatprep.subr.bf16.mxu0 0
    %1037 = vmatpush1.bf16.msra.mxu0 0
    %1038 = vmatprep.subr.bf16.mxu0 0
    %1039 = vmatpush1.bf16.msra.mxu0 0
    %1040 = vmatprep.subr.bf16.mxu0 0
    %1041 = vmatpush1.bf16.msra.mxu0 0
    %1042 = vmatprep.subr.bf16.mxu0 0
    %1043 = vmatpush1.bf16.msra.mxu0 0
    %1044 = vmatprep.mubr.bf16.mxu0 0
    %1045 = vmatmul.mubr.bf16.gmra.mrb[0].mxu0 %v940
    %v1046 = vpop.f32.mrb[0].mxu0
    %v1047 = vadd.f32 %v962, %v1046
    %v1048 = vpop.f32.mrb[0].mxu0
    %v1049 = vpop.f32.mrb[0].mxu0
    %v1050 = vpop.f32.mrb[0].mxu0
    %1051 = vdwg.mxu0
    %1052 = vst [vmem:[%s6] sm:$0xff] %v1047
    // Predicated region
    $region30: #{consistency_scorer_forward.1} parent=1 // pred_check
      _
    $region31: #{consistency_scorer_forward.1} parent=1 // pred_check_branch
      %1054 = sbr.rel (0) target = $region33
    $region32: #{consistency_scorer_forward.1} parent=1 // pred_region
      _
    $region33: #{consistency_scorer_forward.1} parent=1 // pred_fallthru
      _
    // Predicated region
    $region34: #{consistency_scorer_forward.1} parent=1 // pred_check
      _
    $region35: #{consistency_scorer_forward.1} parent=1 // pred_check_branch
      %1056 = sbr.rel (0) target = $region37
    $region36: #{consistency_scorer_forward.1} parent=1 // pred_region
      _
    $region37: #{consistency_scorer_forward.1} parent=1 // pred_fallthru
      _
    // Predicated region
    $region38: #{consistency_scorer_forward.1} parent=1 // pred_check
      _
    $region39: #{consistency_scorer_forward.1} parent=1 // pred_check_branch
      %1058 = sbr.rel (0) target = $region41
    $region40: #{consistency_scorer_forward.1} parent=1 // pred_region
      _
    $region41: #{consistency_scorer_forward.1} parent=1 // pred_fallthru
      _
    // Predicated region
    $region42: #{consistency_scorer_forward.1} parent=1 // pred_check
      _
    $region43: #{consistency_scorer_forward.1} parent=1 // pred_check_branch
      %1060 = sbr.rel (0) target = $region45
    $region44: #{consistency_scorer_forward.1} parent=1 // pred_region
      _
    $region45: #{consistency_scorer_forward.1} parent=1 // pred_fallthru
      _
    %1061 = vsyncpa [#allocation4], 1

</llo_original>
